<compile_context>
chip_gen: v6e
topology: v6e:2x2x1
jax: 0.10.0
libtpu: 0.0.40
codegen_flags: <defaults>
</compile_context>

<pallas_src>
import functools
import numpy as np
import jax
import jax.numpy as jnp
from jax.experimental import pallas as pl
from jax.experimental.pallas import tpu as pltpu

# ---- module hyper-parameters (small synthetic test sizes) ----
B = 2
NUM_SEED = 64
NUM_DEPTH = 4
NUM_ANGLE = 12          # conv3 out-channels (number of in-plane rotation classes)
C_IN = 256
C_HID = 128
BN_EPS = 1e-5

TILE_M = 256            # rows per grid step (bf16 (256,256) activation tile = 128 KiB)
NOUT_PAD = 128          # lane-dense padded output width; real NUM_ANGLE cols sliced off


# =====================================================================
# Fused Pallas kernel: 3 matmuls + 2 ReLUs + lane-dense store
# =====================================================================
def _tolerance_fused_kernel(x_ref, w1_ref, b1_ref, w2_ref, b2_ref, w3_ref, b3_ref, o_ref):
    # x: (TILE_M, 256) bf16.  All weights are VMEM-resident; the hidden
    # activations never leave VMEM.  Accumulation is f32 on the MXU.
    x = x_ref[...]
    h = jnp.dot(x, w1_ref[...], preferred_element_type=jnp.float32) + b1_ref[...]
    h = jnp.maximum(h, 0.0).astype(jnp.bfloat16)
    h = jnp.dot(h, w2_ref[...], preferred_element_type=jnp.float32) + b2_ref[...]
    h = jnp.maximum(h, 0.0).astype(jnp.bfloat16)
    y = jnp.dot(h, w3_ref[...], preferred_element_type=jnp.float32) + b3_ref[...]
    o_ref[...] = y                                      # (TILE_M, 128) f32, unmasked vst


def tolerance_net_forward(params, vp_features, end_points):
    """ToleranceNet.forward.

    vp_features: (B, 256, num_seed, num_depth) float32  (PyTorch NCHW-style layout)
    Writes end_points['grasp_tolerance_pred'] with shape
    (B, num_angle, num_seed, num_depth), matching the PyTorch module.
    """
    b, c, s, d = vp_features.shape
    assert c == C_IN
    m = b * s * d

    # channels-last, per-point rows; bf16 operands (f32 accumulation in-kernel)
    x = jnp.transpose(vp_features, (0, 2, 3, 1)).reshape(m, c).astype(jnp.bfloat16)

    mp = pl.cdiv(m, TILE_M) * TILE_M
    if mp != m:                      # only pad when actually needed
        x = jnp.pad(x, ((0, mp - m), (0, 0)))

    out = pl.pallas_call(
        _tolerance_fused_kernel,
        out_shape=jax.ShapeDtypeStruct((mp, NOUT_PAD), jnp.float32),
        grid=(mp // TILE_M,),
        in_specs=[
            pl.BlockSpec((TILE_M, C_IN), lambda i: (i, 0)),      # activations
            pl.BlockSpec((C_IN, C_HID), lambda i: (0, 0)),       # w1 (BN folded, bf16)
            pl.BlockSpec((1, C_HID), lambda i: (0, 0)),          # b1 (f32)
            pl.BlockSpec((C_HID, C_HID), lambda i: (0, 0)),      # w2
            pl.BlockSpec((1, C_HID), lambda i: (0, 0)),          # b2
            pl.BlockSpec((C_HID, NOUT_PAD), lambda i: (0, 0)),   # w3 (padded to 128 lanes)
            pl.BlockSpec((1, NOUT_PAD), lambda i: (0, 0)),       # b3
        ],
        out_specs=pl.BlockSpec((TILE_M, NOUT_PAD), lambda i: (i, 0)),
        compiler_params=pltpu.CompilerParams(dimension_semantics=("parallel",)),
    )(x, params['w1'], params['b1'], params['w2'], params['b2'],
      params['w3'], params['b3'])

    y = out[:m, :NUM_ANGLE].reshape(b, s, d, NUM_ANGLE)
    end_points['grasp_tolerance_pred'] = jnp.transpose(y, (0, 3, 1, 2))
    return end_points


# =====================================================================
# Parameters (deterministic synthetic) + eval-mode BN folding
# =====================================================================
def init_raw_params(key):
    ks = jax.random.split(key, 14)

    def w(k, shape, scale):
        return scale * jax.random.normal(k, shape, jnp.float32)

    return {
        'conv1_w': w(ks[0], (C_HID, C_IN), 0.05), 'conv1_b': w(ks[1], (C_HID,), 0.05),
        'conv2_w': w(ks[2], (C_HID, C_HID), 0.05), 'conv2_b': w(ks[3], (C_HID,), 0.05),
        'conv3_w': w(ks[4], (NUM_ANGLE, C_HID), 0.1), 'conv3_b': w(ks[5], (NUM_ANGLE,), 0.1),
        'bn1_gamma': 1.0 + w(ks[6], (C_HID,), 0.1), 'bn1_beta': w(ks[7], (C_HID,), 0.1),
        'bn1_mean': w(ks[8], (C_HID,), 0.1), 'bn1_var': jnp.abs(1.0 + w(ks[9], (C_HID,), 0.1)),
        'bn2_gamma': 1.0 + w(ks[10], (C_HID,), 0.1), 'bn2_beta': w(ks[11], (C_HID,), 0.1),
        'bn2_mean': w(ks[12], (C_HID,), 0.1), 'bn2_var': jnp.abs(1.0 + w(ks[13], (C_HID,), 0.1)),
    }


def fold_params(raw):
    """Fold eval-mode BatchNorm into the preceding matmul and cast weights to bf16.

    Kernel weights are stored (K, N) so the kernel computes x @ w.
    bn(conv(x)) = s*(W x + b - mu) + beta  with  s = gamma / sqrt(var + eps)
                = (s*W) x + (s*(b - mu) + beta)
    """
    s1 = raw['bn1_gamma'] / jnp.sqrt(raw['bn1_var'] + BN_EPS)
    w1 = raw['conv1_w'].T * s1[None, :]
    b1 = (raw['conv1_b'] - raw['bn1_mean']) * s1 + raw['bn1_beta']

    s2 = raw['bn2_gamma'] / jnp.sqrt(raw['bn2_var'] + BN_EPS)
    w2 = raw['conv2_w'].T * s2[None, :]
    b2 = (raw['conv2_b'] - raw['bn2_mean']) * s2 + raw['bn2_beta']

    # conv3 has no BN; pad its tiny output dim to 128 lanes for unmasked stores.
    w3 = jnp.zeros((C_HID, NOUT_PAD), jnp.float32).at[:, :NUM_ANGLE].set(raw['conv3_w'].T)
    b3 = jnp.zeros((NOUT_PAD,), jnp.float32).at[:NUM_ANGLE].set(raw['conv3_b'])

    return {
        'w1': w1.astype(jnp.bfloat16), 'b1': b1.reshape(1, C_HID).astype(jnp.float32),
        'w2': w2.astype(jnp.bfloat16), 'b2': b2.reshape(1, C_HID).astype(jnp.float32),
        'w3': w3.astype(jnp.bfloat16), 'b3': b3.reshape(1, NOUT_PAD).astype(jnp.float32),
    }


# =====================================================================
# Pure-JAX f32 reference (unfused conv + BN), for a correctness check
# =====================================================================
def tolerance_net_reference(raw, vp_features):
    b, c, s, d = vp_features.shape
    x = jnp.transpose(vp_features, (0, 2, 3, 1)).reshape(-1, c)

    def bn(y, g, bt, mu, var):
        return g * (y - mu) / jnp.sqrt(var + BN_EPS) + bt

    h = x @ raw['conv1_w'].T + raw['conv1_b']
    h = jnp.maximum(bn(h, raw['bn1_gamma'], raw['bn1_beta'], raw['bn1_mean'], raw['bn1_var']), 0.0)
    h = h @ raw['conv2_w'].T + raw['conv2_b']
    h = jnp.maximum(bn(h, raw['bn2_gamma'], raw['bn2_beta'], raw['bn2_mean'], raw['bn2_var']), 0.0)
    y = h @ raw['conv3_w'].T + raw['conv3_b']
    return jnp.transpose(y.reshape(b, s, d, NUM_ANGLE), (0, 3, 1, 2))


# =====================================================================
if __name__ == "__main__":
    key = jax.random.PRNGKey(0)
    kp, kx = jax.random.split(key)
    raw = init_raw_params(kp)
    params = fold_params(raw)

    vp_features = jax.random.normal(kx, (B, C_IN, NUM_SEED, NUM_DEPTH), jnp.float32)

    fwd = jax.jit(lambda v: tolerance_net_forward(params, v, {})['grasp_tolerance_pred'])
    pred = fwd(vp_features)
    jax.block_until_ready(pred)

    assert pred.shape == (B, NUM_ANGLE, NUM_SEED, NUM_DEPTH)
    assert bool(jnp.all(jnp.isfinite(pred)))

    ref = tolerance_net_reference(raw, vp_features)
    max_err = float(jnp.max(jnp.abs(pred - ref)))
    assert max_err < 0.05, f"max abs error vs f32 reference: {max_err}"

    print("KERNEL_OK")
</pallas_src>

<mosaic_0001>
module attributes {stable_mosaic.version = 11 : i64} {
  func.func @_tolerance_fused_kernel(%arg0: i32, %arg1: memref<256x256xbf16, #tpu.memory_space<vmem>>, %arg2: memref<256x128xbf16, #tpu.memory_space<vmem>>, %arg3: memref<1x128xf32, #tpu.memory_space<vmem>>, %arg4: memref<128x128xbf16, #tpu.memory_space<vmem>>, %arg5: memref<1x128xf32, #tpu.memory_space<vmem>>, %arg6: memref<128x128xbf16, #tpu.memory_space<vmem>>, %arg7: memref<1x128xf32, #tpu.memory_space<vmem>>, %arg8: memref<256x128xf32, #tpu.memory_space<vmem>>) attributes {dimension_semantics = [#tpu.dimension_semantics<parallel>], iteration_bounds = array<i64: 2>, scalar_prefetch = 0 : i64, scratch_operands = 0 : i64, tpu.core_type = #tpu.core_type<tc>, window_params = [{transform_indices = @transform_0, window_bounds = array<i64: 256, 256>}, {pipeline_mode = #tpu.pipeline_mode<synchronous>, transform_indices = @transform_1, window_bounds = array<i64: 256, 128>}, {pipeline_mode = #tpu.pipeline_mode<synchronous>, transform_indices = @transform_2, window_bounds = array<i64: 1, 128>}, {pipeline_mode = #tpu.pipeline_mode<synchronous>, transform_indices = @transform_3, window_bounds = array<i64: 128, 128>}, {pipeline_mode = #tpu.pipeline_mode<synchronous>, transform_indices = @transform_4, window_bounds = array<i64: 1, 128>}, {pipeline_mode = #tpu.pipeline_mode<synchronous>, transform_indices = @transform_5, window_bounds = array<i64: 128, 128>}, {pipeline_mode = #tpu.pipeline_mode<synchronous>, transform_indices = @transform_6, window_bounds = array<i64: 1, 128>}, {transform_indices = @transform_7, window_bounds = array<i64: 256, 128>}]} {
    %c0 = arith.constant 0 : index
    %c0_0 = arith.constant 0 : index
    %0 = vector.load %arg1[%c0, %c0_0] : memref<256x256xbf16, #tpu.memory_space<vmem>>, vector<256x256xbf16>
    %c0_1 = arith.constant 0 : index
    %c0_2 = arith.constant 0 : index
    %1 = vector.load %arg2[%c0_1, %c0_2] : memref<256x128xbf16, #tpu.memory_space<vmem>>, vector<256x128xbf16>
    %cst = arith.constant dense<0.000000e+00> : vector<256x128xf32>
    %2 = tpu.matmul %0, %1, %cst {dimension_numbers = #tpu.dot_dimension_numbers<[1], [0], [0], [1], [0, 0, 1, 1], [], []>} : vector<256x256xbf16>, vector<256x128xbf16>, vector<256x128xf32> -> vector<256x128xf32>
    %c0_3 = arith.constant 0 : index
    %c0_4 = arith.constant 0 : index
    %3 = vector.load %arg3[%c0_3, %c0_4] : memref<1x128xf32, #tpu.memory_space<vmem>>, vector<1x128xf32>
    %4 = vector.broadcast %3 : vector<1x128xf32> to vector<256x128xf32>
    %5 = arith.addf %2, %4 : vector<256x128xf32>
    %cst_5 = arith.constant 0.000000e+00 : f32
    %6 = vector.broadcast %cst_5 : f32 to vector<256x128xf32>
    %7 = arith.maximumf %5, %6 : vector<256x128xf32>
    %8 = arith.truncf %7 : vector<256x128xf32> to vector<256x128xbf16>
    %c0_6 = arith.constant 0 : index
    %c0_7 = arith.constant 0 : index
    %9 = vector.load %arg4[%c0_6, %c0_7] : memref<128x128xbf16, #tpu.memory_space<vmem>>, vector<128x128xbf16>
    %cst_8 = arith.constant dense<0.000000e+00> : vector<256x128xf32>
    %10 = tpu.matmul %8, %9, %cst_8 {dimension_numbers = #tpu.dot_dimension_numbers<[1], [0], [0], [1], [0, 0, 1, 1], [], []>} : vector<256x128xbf16>, vector<128x128xbf16>, vector<256x128xf32> -> vector<256x128xf32>
    %c0_9 = arith.constant 0 : index
    %c0_10 = arith.constant 0 : index
    %11 = vector.load %arg5[%c0_9, %c0_10] : memref<1x128xf32, #tpu.memory_space<vmem>>, vector<1x128xf32>
    %12 = vector.broadcast %11 : vector<1x128xf32> to vector<256x128xf32>
    %13 = arith.addf %10, %12 : vector<256x128xf32>
    %cst_11 = arith.constant 0.000000e+00 : f32
    %14 = vector.broadcast %cst_11 : f32 to vector<256x128xf32>
    %15 = arith.maximumf %13, %14 : vector<256x128xf32>
    %16 = arith.truncf %15 : vector<256x128xf32> to vector<256x128xbf16>
    %c0_12 = arith.constant 0 : index
    %c0_13 = arith.constant 0 : index
    %17 = vector.load %arg6[%c0_12, %c0_13] : memref<128x128xbf16, #tpu.memory_space<vmem>>, vector<128x128xbf16>
    %cst_14 = arith.constant dense<0.000000e+00> : vector<256x128xf32>
    %18 = tpu.matmul %16, %17, %cst_14 {dimension_numbers = #tpu.dot_dimension_numbers<[1], [0], [0], [1], [0, 0, 1, 1], [], []>} : vector<256x128xbf16>, vector<128x128xbf16>, vector<256x128xf32> -> vector<256x128xf32>
    %c0_15 = arith.constant 0 : index
    %c0_16 = arith.constant 0 : index
    %19 = vector.load %arg7[%c0_15, %c0_16] : memref<1x128xf32, #tpu.memory_space<vmem>>, vector<1x128xf32>
    %20 = vector.broadcast %19 : vector<1x128xf32> to vector<256x128xf32>
    %21 = arith.addf %18, %20 : vector<256x128xf32>
    %c0_17 = arith.constant 0 : index
    %c0_18 = arith.constant 0 : index
    %22 = vector.load %arg8[%c0_17, %c0_18] : memref<256x128xf32, #tpu.memory_space<vmem>>, vector<256x128xf32>
    tpu.vector_store %arg8[%c0_17, %c0_18], %21 {strides = array<i32>} : memref<256x128xf32, #tpu.memory_space<vmem>>, vector<256x128xf32>,
    return
  }
  func.func @transform_0(%arg0: i32) -> (i32, i32) {
    %c0_i32 = arith.constant 0 : i32
    %c0_i32_0 = arith.constant 0 : i32
    return %arg0, %c0_i32 : i32, i32
  }
  func.func @transform_1(%arg0: i32) -> (i32, i32) {
    %c0_i32 = arith.constant 0 : i32
    %c0_i32_0 = arith.constant 0 : i32
    %c0_i32_1 = arith.constant 0 : i32
    return %c0_i32, %c0_i32_0 : i32, i32
  }
  func.func @transform_2(%arg0: i32) -> (i32, i32) {
    %c0_i32 = arith.constant 0 : i32
    %c0_i32_0 = arith.constant 0 : i32
    %c0_i32_1 = arith.constant 0 : i32
    return %c0_i32, %c0_i32_0 : i32, i32
  }
  func.func @transform_3(%arg0: i32) -> (i32, i32) {
    %c0_i32 = arith.constant 0 : i32
    %c0_i32_0 = arith.constant 0 : i32
    %c0_i32_1 = arith.constant 0 : i32
    return %c0_i32, %c0_i32_0 : i32, i32
  }
  func.func @transform_4(%arg0: i32) -> (i32, i32) {
    %c0_i32 = arith.constant 0 : i32
    %c0_i32_0 = arith.constant 0 : i32
    %c0_i32_1 = arith.constant 0 : i32
    return %c0_i32, %c0_i32_0 : i32, i32
  }
  func.func @transform_5(%arg0: i32) -> (i32, i32) {
    %c0_i32 = arith.constant 0 : i32
    %c0_i32_0 = arith.constant 0 : i32
    %c0_i32_1 = arith.constant 0 : i32
    return %c0_i32, %c0_i32_0 : i32, i32
  }
  func.func @transform_6(%arg0: i32) -> (i32, i32) {
    %c0_i32 = arith.constant 0 : i32
    %c0_i32_0 = arith.constant 0 : i32
    %c0_i32_1 = arith.constant 0 : i32
    return %c0_i32, %c0_i32_0 : i32, i32
  }
  func.func @transform_7(%arg0: i32) -> (i32, i32) {
    %c0_i32 = arith.constant 0 : i32
    %c0_i32_0 = arith.constant 0 : i32
    return %arg0, %c0_i32 : i32, i32
  }
}

</mosaic_0001>

<llo_original>
// kernel: _lambda_.1
$region0: #{_lambda_.1}
  #allocation0 [shape = 'u32[]', space=smem, size = 0x4, offset = 0x4, fixed_abs, tag = 'smem constant byte address 0x4 - core index']
  #allocation1 [shape = 'u32[144,128]{1,0:T(1,128)}', space=vmem, size = 0x12000, scoped, tag = 'internal scratch']
  %s0 = inlined_call_operand.vmem [shape: bf16[512,256], index: 0, kind: input, shape index: {}]
  %s1 = inlined_call_operand.vmem [shape: bf16[256,128], index: 1, kind: input, shape index: {}]
  %s2 = inlined_call_operand.vmem [shape: f32[1,128], index: 2, kind: input, shape index: {}]
  %s3 = inlined_call_operand.vmem [shape: bf16[128,128], index: 3, kind: input, shape index: {}]
  %s4 = inlined_call_operand.vmem [shape: f32[1,128], index: 4, kind: input, shape index: {}]
  %s5 = inlined_call_operand.vmem [shape: bf16[128,128], index: 5, kind: input, shape index: {}]
  %s6 = inlined_call_operand.vmem [shape: f32[1,128], index: 6, kind: input, shape index: {}]
  %s7 = inlined_call_operand.vmem [shape: f32[512,128], index: 7, kind: output, shape index: {}]
  %s8 = sld [smem:[#allocation0]]
  $region61: #{_lambda_.1} parent=0
    _
  %s10 = ssub.s32 1, %s8
  %s11 = scalar_select 0, %s10, %s8
  loop: start=0, step=1, limit=4
  $region2: #{_lambda_.1} parent=0 // loop_pre_header
    _
  $region3: #{_lambda_.1} parent=0 // loop_header
    %s13 = sphi 0, %s17
    %p14 = scmp.ge.s32.totalorder %s13, 4
    %s23 = sphi 0, %s25
    %s26 = sphi 0, %s23
    %s27 = sphi 0, %s26
    %s43 = sphi 0, %s27
    %s47 = sphi 0, %s47
    %s49 = sphi 0, %s47
    %s50 = sphi 0, %s49
    %s64 = sphi 0, %s50
    %s68 = sphi 0, %s68
    %s70 = sphi 0, %s68
    %s71 = sphi 0, %s70
    %s85 = sphi 0, %s71
    %s89 = sphi 0, %s89
    %s91 = sphi 0, %s89
    %s92 = sphi 0, %s91
    %s106 = sphi 0, %s92
    %s110 = sphi 0, %s110
    %s112 = sphi 0, %s110
    %s113 = sphi 0, %s112
    %s127 = sphi 0, %s113
    %s131 = sphi 0, %s131
    %s133 = sphi 0, %s131
    %s134 = sphi 0, %s133
    %s148 = sphi 0, %s134
    %s152 = sphi 0, %s152
    %s154 = sphi 0, %s152
    %s155 = sphi 0, %s154
    %s169 = sphi 0, %s155
    %s175 = sphi 0, %s177
    %s178 = sphi 0, %s175
    %s179 = sphi 0, %s178
    %s195 = sphi 0, %s179
  $region4: #{_lambda_.1} parent=0 // loop_header_branch
    %16 = sbr.rel (%p14) target = $region8
  $region5: #{_lambda_.1} parent=0 // loop_body
    %s18 = ssub.s32 %s13, 1
    %s19 = ssub.s32 %s13, 2
    %s20 = sadd.s32 %s13, 1
    %s21 = ssub.s32 %s13, %s20
    %p22 = scmp.eq.s32.totalorder %s21, 0
    %s24 = sadd.s32 %s23, 1
    %s25 = scalar_select %p22, %s23, %s24
    %p28 = pneg %p22
    %p29 = scmp.eq.s32.totalorder %s13, 1
    %p30 = por %p28, %p29
    %p31 = scmp.ne.s32.totalorder %s23, %s26
    %p32 = scmp.eq.s32.totalorder %s13, 0
    %p33 = por %p31, %p32
    %p34 = scmp.ne.s32.totalorder %s23, %s26
    %p35 = scmp.eq.s32.totalorder %s18, 1
    %p36 = por %p34, %p35
    %p37 = scmp.ne.s32.totalorder %s26, %s27
    %p38 = scmp.eq.s32.totalorder %s18, 0
    %p39 = por %p37, %p38
    %p40 = scmp.ne.s32.totalorder %s26, %s27
    %p41 = scmp.eq.s32.totalorder %s19, 1
    %p42 = por %p40, %p41
    %p44 = scmp.ne.s32.totalorder %s27, %s43
    %p45 = scmp.eq.s32.totalorder %s19, 0
    %p46 = por %p44, %p45
    %s48 = sadd.s32 %s47, 1
    %p51 = scmp.eq.s32.totalorder %s13, 1
    %p52 = scmp.ne.s32.totalorder %s47, %s49
    %p53 = scmp.eq.s32.totalorder %s13, 0
    %p54 = por %p52, %p53
    %p55 = scmp.ne.s32.totalorder %s47, %s49
    %p56 = scmp.eq.s32.totalorder %s18, 1
    %p57 = por %p55, %p56
    %p58 = scmp.ne.s32.totalorder %s49, %s50
    %p59 = scmp.eq.s32.totalorder %s18, 0
    %p60 = por %p58, %p59
    %p61 = scmp.ne.s32.totalorder %s49, %s50
    %p62 = scmp.eq.s32.totalorder %s19, 1
    %p63 = por %p61, %p62
    %p65 = scmp.ne.s32.totalorder %s50, %s64
    %p66 = scmp.eq.s32.totalorder %s19, 0
    %p67 = por %p65, %p66
    %s69 = sadd.s32 %s68, 1
    %p72 = scmp.eq.s32.totalorder %s13, 1
    %p73 = scmp.ne.s32.totalorder %s68, %s70
    %p74 = scmp.eq.s32.totalorder %s13, 0
    %p75 = por %p73, %p74
    %p76 = scmp.ne.s32.totalorder %s68, %s70
    %p77 = scmp.eq.s32.totalorder %s18, 1
    %p78 = por %p76, %p77
    %p79 = scmp.ne.s32.totalorder %s70, %s71
    %p80 = scmp.eq.s32.totalorder %s18, 0
    %p81 = por %p79, %p80
    %p82 = scmp.ne.s32.totalorder %s70, %s71
    %p83 = scmp.eq.s32.totalorder %s19, 1
    %p84 = por %p82, %p83
    %p86 = scmp.ne.s32.totalorder %s71, %s85
    %p87 = scmp.eq.s32.totalorder %s19, 0
    %p88 = por %p86, %p87
    %s90 = sadd.s32 %s89, 1
    %p93 = scmp.eq.s32.totalorder %s13, 1
    %p94 = scmp.ne.s32.totalorder %s89, %s91
    %p95 = scmp.eq.s32.totalorder %s13, 0
    %p96 = por %p94, %p95
    %p97 = scmp.ne.s32.totalorder %s89, %s91
    %p98 = scmp.eq.s32.totalorder %s18, 1
    %p99 = por %p97, %p98
    %p100 = scmp.ne.s32.totalorder %s91, %s92
    %p101 = scmp.eq.s32.totalorder %s18, 0
    %p102 = por %p100, %p101
    %p103 = scmp.ne.s32.totalorder %s91, %s92
    %p104 = scmp.eq.s32.totalorder %s19, 1
    %p105 = por %p103, %p104
    %p107 = scmp.ne.s32.totalorder %s92, %s106
    %p108 = scmp.eq.s32.totalorder %s19, 0
    %p109 = por %p107, %p108
    %s111 = sadd.s32 %s110, 1
    %p114 = scmp.eq.s32.totalorder %s13, 1
    %p115 = scmp.ne.s32.totalorder %s110, %s112
    %p116 = scmp.eq.s32.totalorder %s13, 0
    %p117 = por %p115, %p116
    %p118 = scmp.ne.s32.totalorder %s110, %s112
    %p119 = scmp.eq.s32.totalorder %s18, 1
    %p120 = por %p118, %p119
    %p121 = scmp.ne.s32.totalorder %s112, %s113
    %p122 = scmp.eq.s32.totalorder %s18, 0
    %p123 = por %p121, %p122
    %p124 = scmp.ne.s32.totalorder %s112, %s113
    %p125 = scmp.eq.s32.totalorder %s19, 1
    %p126 = por %p124, %p125
    %p128 = scmp.ne.s32.totalorder %s113, %s127
    %p129 = scmp.eq.s32.totalorder %s19, 0
    %p130 = por %p128, %p129
    %s132 = sadd.s32 %s131, 1
    %p135 = scmp.eq.s32.totalorder %s13, 1
    %p136 = scmp.ne.s32.totalorder %s131, %s133
    %p137 = scmp.eq.s32.totalorder %s13, 0
    %p138 = por %p136, %p137
    %p139 = scmp.ne.s32.totalorder %s131, %s133
    %p140 = scmp.eq.s32.totalorder %s18, 1
    %p141 = por %p139, %p140
    %p142 = scmp.ne.s32.totalorder %s133, %s134
    %p143 = scmp.eq.s32.totalorder %s18, 0
    %p144 = por %p142, %p143
    %p145 = scmp.ne.s32.totalorder %s133, %s134
    %p146 = scmp.eq.s32.totalorder %s19, 1
    %p147 = por %p145, %p146
    %p149 = scmp.ne.s32.totalorder %s134, %s148
    %p150 = scmp.eq.s32.totalorder %s19, 0
    %p151 = por %p149, %p150
    %s153 = sadd.s32 %s152, 1
    %p156 = scmp.eq.s32.totalorder %s13, 1
    %p157 = scmp.ne.s32.totalorder %s152, %s154
    %p158 = scmp.eq.s32.totalorder %s13, 0
    %p159 = por %p157, %p158
    %p160 = scmp.ne.s32.totalorder %s152, %s154
    %p161 = scmp.eq.s32.totalorder %s18, 1
    %p162 = por %p160, %p161
    %p163 = scmp.ne.s32.totalorder %s154, %s155
    %p164 = scmp.eq.s32.totalorder %s18, 0
    %p165 = por %p163, %p164
    %p166 = scmp.ne.s32.totalorder %s154, %s155
    %p167 = scmp.eq.s32.totalorder %s19, 1
    %p168 = por %p166, %p167
    %p170 = scmp.ne.s32.totalorder %s155, %s169
    %p171 = scmp.eq.s32.totalorder %s19, 0
    %p172 = por %p170, %p171
    %s173 = ssub.s32 %s13, %s20
    %p174 = scmp.eq.s32.totalorder %s173, 0
    %s176 = sadd.s32 %s175, 1
    %s177 = scalar_select %p174, %s175, %s176
    %p180 = pneg %p174
    %p181 = scmp.eq.s32.totalorder %s13, 1
    %p182 = por %p180, %p181
    %p183 = scmp.ne.s32.totalorder %s175, %s178
    %p184 = scmp.eq.s32.totalorder %s13, 0
    %p185 = por %p183, %p184
    %p186 = scmp.ne.s32.totalorder %s175, %s178
    %p187 = scmp.eq.s32.totalorder %s18, 1
    %p188 = por %p186, %p187
    %p189 = scmp.ne.s32.totalorder %s178, %s179
    %p190 = scmp.eq.s32.totalorder %s18, 0
    %p191 = por %p189, %p190
    %p192 = scmp.ne.s32.totalorder %s178, %s179
    %p193 = scmp.eq.s32.totalorder %s19, 1
    %p194 = por %p192, %p193
    %p196 = scmp.ne.s32.totalorder %s179, %s195
    %p197 = scmp.eq.s32.totalorder %s19, 0
    %p198 = por %p196, %p197
    %p199 = scmp.le.s32.totalorder 1, %s13
    %p200 = scmp.lt.s32.totalorder %s13, 3
    %p201 = pnand %p199, %p200
    %p202 = pneg %p201
    // Predicated region
    $region9: #{_lambda_.1} parent=5 // pred_check
      _
    $region10: #{_lambda_.1} parent=5 // pred_check_branch
      %204 = sbr.rel (%p201) target = $region12
    $region11: #{_lambda_.1} parent=5 // pred_region
      %s205 = ssub.s32 %s13, 1
      // Predicated region
      $region13: #{_lambda_.1} parent=11 // pred_check
        %p206 = pneg %p60
      $region14: #{_lambda_.1} parent=11 // pred_check_branch
        %208 = sbr.rel (%p206) target = $region16
      $region15: #{_lambda_.1} parent=11 // pred_region
        _
      $region16: #{_lambda_.1} parent=11 // pred_fallthru
        _
      // Predicated region
      $region17: #{_lambda_.1} parent=11 // pred_check
        %p209 = pneg %p81
      $region18: #{_lambda_.1} parent=11 // pred_check_branch
        %211 = sbr.rel (%p209) target = $region20
      $region19: #{_lambda_.1} parent=11 // pred_region
        _
      $region20: #{_lambda_.1} parent=11 // pred_fallthru
        _
      // Predicated region
      $region21: #{_lambda_.1} parent=11 // pred_check
        %p212 = pneg %p102
      $region22: #{_lambda_.1} parent=11 // pred_check_branch
        %214 = sbr.rel (%p212) target = $region24
      $region23: #{_lambda_.1} parent=11 // pred_region
        _
      $region24: #{_lambda_.1} parent=11 // pred_fallthru
        _
      // Predicated region
      $region25: #{_lambda_.1} parent=11 // pred_check
        %p215 = pneg %p123
      $region26: #{_lambda_.1} parent=11 // pred_check_branch
        %217 = sbr.rel (%p215) target = $region28
      $region27: #{_lambda_.1} parent=11 // pred_region
        _
      $region28: #{_lambda_.1} parent=11 // pred_fallthru
        _
      // Predicated region
      $region29: #{_lambda_.1} parent=11 // pred_check
        %p218 = pneg %p144
      $region30: #{_lambda_.1} parent=11 // pred_check_branch
        %220 = sbr.rel (%p218) target = $region32
      $region31: #{_lambda_.1} parent=11 // pred_region
        _
      $region32: #{_lambda_.1} parent=11 // pred_fallthru
        _
      // Predicated region
      $region33: #{_lambda_.1} parent=11 // pred_check
        %p221 = pneg %p165
      $region34: #{_lambda_.1} parent=11 // pred_check_branch
        %223 = sbr.rel (%p221) target = $region36
      $region35: #{_lambda_.1} parent=11 // pred_region
        _
      $region36: #{_lambda_.1} parent=11 // pred_fallthru
        _
    $region12: #{_lambda_.1} parent=5 // pred_fallthru
      _
    %p224 = scmp.lt.s32.totalorder %s13, 2
    // Predicated region
    $region37: #{_lambda_.1} parent=5 // pred_check
      %p225 = pneg %p224
    $region38: #{_lambda_.1} parent=5 // pred_check_branch
      %227 = sbr.rel (%p225) target = $region40
    $region39: #{_lambda_.1} parent=5 // pred_region
      // Predicated region
      $region41: #{_lambda_.1} parent=39 // pred_check
        %p228 = pneg %p33
      $region42: #{_lambda_.1} parent=39 // pred_check_branch
        %230 = sbr.rel (%p228) target = $region44
      $region43: #{_lambda_.1} parent=39 // pred_region
        %s231 = smul.u32 32, %s13
        %p232 = scmp.lt.s32.totalorder %s231, 63
        %s233 = scalar_select %p232, %s231, 63
        %s234 = smul.addr %s233, 2
        %s235 = smul.addr %s234, 4
        %s236 = scalar_lea.vmem %s0, %s235
        %s237 = smul.u32 32, %s13
      $region44: #{_lambda_.1} parent=39 // pred_fallthru
        _
    $region40: #{_lambda_.1} parent=5 // pred_fallthru
      _
    %p238 = scmp.le.s32.totalorder 1, %s13
    %p239 = scmp.lt.s32.totalorder %s13, 3
    %p240 = pnand %p238, %p239
    %p241 = pneg %p240
    // Predicated region
    $region45: #{_lambda_.1} parent=5 // pred_check
      _
    $region46: #{_lambda_.1} parent=5 // pred_check_branch
      %243 = sbr.rel (%p240) target = $region48
    $region47: #{_lambda_.1} parent=5 // pred_region
      %s244 = ssub.s32 %s13, 1
      %s245 = smul.u32 32, %s18
      %p246 = scmp.lt.s32.totalorder %s245, 63
      %s247 = scalar_select %p246, %s245, 63
      %s248 = smul.addr %s247, 2
      %s249 = smul.addr %s248, 4
      %s250 = scalar_lea.vmem %s0, %s249
      %p251 = pneg %p39
      %p252 = pneg %p36
      %p253 = pneg %p60
      %p254 = pneg %p57
      %p255 = pneg %p81
      %p256 = pneg %p78
      %p257 = pneg %p102
      %p258 = pneg %p99
      %p259 = pneg %p123
      %p260 = pneg %p120
      %p261 = pneg %p144
      %p262 = pneg %p141
      %p263 = pneg %p165
      %p264 = pneg %p162
      %p265 = pneg %p191
      %p266 = pneg %p188
      %s267 = smul.u32 32, %s18
      %p268 = scmp.lt.s32.totalorder %s267, 63
      %s269 = scalar_select %p268, %s267, 63
      %s270 = smul.addr %s269, 8
      %s271 = scalar_lea.vmem %s7, %s270
      %s272 = smul.u32 32, %s18
      %p273 = scmp.lt.s32.totalorder %s272, 63
      %s274 = scalar_select %p273, %s272, 63
      %s275 = smul.addr %s274, 2
      %s276 = smul.addr %s275, 4
      %s277 = scalar_lea.vmem %s0, %s276
      %s278 = smul.u32 32, %s18
      %s279 = smul.u32 32, %s18
      %p280 = scmp.lt.s32.totalorder %s279, 63
      %s281 = scalar_select %p280, %s279, 63
      %s282 = smul.addr %s281, 8
      %s283 = scalar_lea.vmem %s7, %s282
      %s284 = smul.u32 32, %s18
      %v286 = vld [vmem:[%s277] sm:$0xff]
      %v287 = vld [vmem:[%s277 + $0x8] sm:$0xff]
      %v288 = vld [vmem:[%s277 + $0x10] sm:$0xff]
      %v289 = vld [vmem:[%s277 + $0x18] sm:$0xff]
      %v290 = vld [vmem:[%s277 + $0x20] sm:$0xff]
      %v291 = vld [vmem:[%s277 + $0x28] sm:$0xff]
      %v292 = vld [vmem:[%s277 + $0x30] sm:$0xff]
      %v293 = vld [vmem:[%s277 + $0x38] sm:$0xff]
      %v294 = vld [vmem:[%s277 + $0x40] sm:$0xff]
      %v295 = vld [vmem:[%s277 + $0x48] sm:$0xff]
      %v296 = vld [vmem:[%s277 + $0x50] sm:$0xff]
      %v297 = vld [vmem:[%s277 + $0x58] sm:$0xff]
      %v298 = vld [vmem:[%s277 + $0x60] sm:$0xff]
      %v299 = vld [vmem:[%s277 + $0x68] sm:$0xff]
      %v300 = vld [vmem:[%s277 + $0x70] sm:$0xff]
      %v301 = vld [vmem:[%s277 + $0x78] sm:$0xff]
      %v302 = vld [vmem:[%s277 + $0x80] sm:$0xff]
      %v303 = vld [vmem:[%s277 + $0x88] sm:$0xff]
      %v304 = vld [vmem:[%s277 + $0x90] sm:$0xff]
      %v305 = vld [vmem:[%s277 + $0x98] sm:$0xff]
      %v306 = vld [vmem:[%s277 + $0xa0] sm:$0xff]
      %v307 = vld [vmem:[%s277 + $0xa8] sm:$0xff]
      %v308 = vld [vmem:[%s277 + $0xb0] sm:$0xff]
      %v309 = vld [vmem:[%s277 + $0xb8] sm:$0xff]
      %v310 = vld [vmem:[%s277 + $0xc0] sm:$0xff]
      %v311 = vld [vmem:[%s277 + $0xc8] sm:$0xff]
      %v312 = vld [vmem:[%s277 + $0xd0] sm:$0xff]
      %v313 = vld [vmem:[%s277 + $0xd8] sm:$0xff]
      %v314 = vld [vmem:[%s277 + $0xe0] sm:$0xff]
      %v315 = vld [vmem:[%s277 + $0xe8] sm:$0xff]
      %v316 = vld [vmem:[%s277 + $0xf0] sm:$0xff]
      %v317 = vld [vmem:[%s277 + $0xf8] sm:$0xff]
      %v318 = vld [vmem:[%s1] sm:$0xf]
      %v319 = vld [vmem:[%s1 + $0x4] sm:$0xf]
      %v320 = vld [vmem:[%s1 + $0x8] sm:$0xf]
      %v321 = vld [vmem:[%s1 + $0xc] sm:$0xf]
      %v322 = vld [vmem:[%s1 + $0x10] sm:$0xf]
      %v323 = vld [vmem:[%s1 + $0x14] sm:$0xf]
      %v324 = vld [vmem:[%s1 + $0x18] sm:$0xf]
      %v325 = vld [vmem:[%s1 + $0x1c] sm:$0xf]
      %v326 = vld [vmem:[%s1 + $0x20] sm:$0xf]
      %v327 = vld [vmem:[%s1 + $0x24] sm:$0xf]
      %v328 = vld [vmem:[%s1 + $0x28] sm:$0xf]
      %v329 = vld [vmem:[%s1 + $0x2c] sm:$0xf]
      %v330 = vld [vmem:[%s1 + $0x30] sm:$0xf]
      %v331 = vld [vmem:[%s1 + $0x34] sm:$0xf]
      %v332 = vld [vmem:[%s1 + $0x38] sm:$0xf]
      %v333 = vld [vmem:[%s1 + $0x3c] sm:$0xf]
      %v334 = vld [vmem:[%s1 + $0x40] sm:$0xf]
      %v335 = vld [vmem:[%s1 + $0x44] sm:$0xf]
      %v336 = vld [vmem:[%s1 + $0x48] sm:$0xf]
      %v337 = vld [vmem:[%s1 + $0x4c] sm:$0xf]
      %v338 = vld [vmem:[%s1 + $0x50] sm:$0xf]
      %v339 = vld [vmem:[%s1 + $0x54] sm:$0xf]
      %v340 = vld [vmem:[%s1 + $0x58] sm:$0xf]
      %v341 = vld [vmem:[%s1 + $0x5c] sm:$0xf]
      %v342 = vld [vmem:[%s1 + $0x60] sm:$0xf]
      %v343 = vld [vmem:[%s1 + $0x64] sm:$0xf]
      %v344 = vld [vmem:[%s1 + $0x68] sm:$0xf]
      %v345 = vld [vmem:[%s1 + $0x6c] sm:$0xf]
      %v346 = vld [vmem:[%s1 + $0x70] sm:$0xf]
      %v347 = vld [vmem:[%s1 + $0x74] sm:$0xf]
      %v348 = vld [vmem:[%s1 + $0x78] sm:$0xf]
      %v349 = vld [vmem:[%s1 + $0x7c] sm:$0xf]
      %v350 = vld [vmem:[%s2] sm:$0x1]
      %v352 = vlaneseq
      %v353 = vshrl.u32 %v352, 7
      %v354 = vsub.s32 0, %v353
      %v355 = vrot.slane %v350, %v354
      %v389 = vunpack.c.l.b16 %v286
      %v390 = vunpack.c.h.b16 %v286
      %v391 = vunpack.c.l.b16 %v287
      %v392 = vunpack.c.h.b16 %v287
      %v393 = vunpack.c.l.b16 %v288
      %v394 = vunpack.c.h.b16 %v288
      %v395 = vunpack.c.l.b16 %v289
      %v396 = vunpack.c.h.b16 %v289
      %v397 = vunpack.c.l.b16 %v290
      %v398 = vunpack.c.h.b16 %v290
      %v399 = vunpack.c.l.b16 %v291
      %v400 = vunpack.c.h.b16 %v291
      %v401 = vunpack.c.l.b16 %v292
      %v402 = vunpack.c.h.b16 %v292
      %v403 = vunpack.c.l.b16 %v293
      %v404 = vunpack.c.h.b16 %v293
      %v405 = vunpack.c.l.b16 %v294
      %v406 = vunpack.c.h.b16 %v294
      %v407 = vunpack.c.l.b16 %v295
      %v408 = vunpack.c.h.b16 %v295
      %v409 = vunpack.c.l.b16 %v296
      %v410 = vunpack.c.h.b16 %v296
      %v411 = vunpack.c.l.b16 %v297
      %v412 = vunpack.c.h.b16 %v297
      %v413 = vunpack.c.l.b16 %v298
      %v414 = vunpack.c.h.b16 %v298
      %v415 = vunpack.c.l.b16 %v299
      %v416 = vunpack.c.h.b16 %v299
      %v417 = vunpack.c.l.b16 %v300
      %v418 = vunpack.c.h.b16 %v300
      %v419 = vunpack.c.l.b16 %v301
      %v420 = vunpack.c.h.b16 %v301
      %v421 = vunpack.c.l.b16 %v302
      %v422 = vunpack.c.h.b16 %v302
      %v423 = vunpack.c.l.b16 %v303
      %v424 = vunpack.c.h.b16 %v303
      %v425 = vunpack.c.l.b16 %v304
      %v426 = vunpack.c.h.b16 %v304
      %v427 = vunpack.c.l.b16 %v305
      %v428 = vunpack.c.h.b16 %v305
      %v429 = vunpack.c.l.b16 %v306
      %v430 = vunpack.c.h.b16 %v306
      %v431 = vunpack.c.l.b16 %v307
      %v432 = vunpack.c.h.b16 %v307
      %v433 = vunpack.c.l.b16 %v308
      %v434 = vunpack.c.h.b16 %v308
      %v435 = vunpack.c.l.b16 %v309
      %v436 = vunpack.c.h.b16 %v309
      %v437 = vunpack.c.l.b16 %v310
      %v438 = vunpack.c.h.b16 %v310
      %v439 = vunpack.c.l.b16 %v311
      %v440 = vunpack.c.h.b16 %v311
      %v441 = vunpack.c.l.b16 %v312
      %v442 = vunpack.c.h.b16 %v312
      %v443 = vunpack.c.l.b16 %v313
      %v444 = vunpack.c.h.b16 %v313
      %v445 = vunpack.c.l.b16 %v314
      %v446 = vunpack.c.h.b16 %v314
      %v447 = vunpack.c.l.b16 %v315
      %v448 = vunpack.c.h.b16 %v315
      %v449 = vunpack.c.l.b16 %v316
      %v450 = vunpack.c.h.b16 %v316
      %v451 = vunpack.c.l.b16 %v317
      %v452 = vunpack.c.h.b16 %v317
      %v453 = vpack.c.b16 %v391, %v389
      %v454 = vpack.c.b16 %v392, %v390
      %v455 = vpack.c.b16 %v395, %v393
      %v456 = vpack.c.b16 %v396, %v394
      %v457 = vpack.c.b16 %v399, %v397
      %v458 = vpack.c.b16 %v400, %v398
      %v459 = vpack.c.b16 %v403, %v401
      %v460 = vpack.c.b16 %v404, %v402
      %v461 = vpack.c.b16 %v407, %v405
      %v462 = vpack.c.b16 %v408, %v406
      %v463 = vpack.c.b16 %v411, %v409
      %v464 = vpack.c.b16 %v412, %v410
      %v465 = vpack.c.b16 %v415, %v413
      %v466 = vpack.c.b16 %v416, %v414
      %v467 = vpack.c.b16 %v419, %v417
      %v468 = vpack.c.b16 %v420, %v418
      %v469 = vpack.c.b16 %v423, %v421
      %v470 = vpack.c.b16 %v424, %v422
      %v471 = vpack.c.b16 %v427, %v425
      %v472 = vpack.c.b16 %v428, %v426
      %v473 = vpack.c.b16 %v431, %v429
      %v474 = vpack.c.b16 %v432, %v430
      %v475 = vpack.c.b16 %v435, %v433
      %v476 = vpack.c.b16 %v436, %v434
      %v477 = vpack.c.b16 %v439, %v437
      %v478 = vpack.c.b16 %v440, %v438
      %v479 = vpack.c.b16 %v443, %v441
      %v480 = vpack.c.b16 %v444, %v442
      %v481 = vpack.c.b16 %v447, %v445
      %v482 = vpack.c.b16 %v448, %v446
      %v483 = vpack.c.b16 %v451, %v449
      %v484 = vpack.c.b16 %v452, %v450
      %v549 = vunpack.c.l.b16 %v318
      %v550 = vunpack.c.l.b16 %v319
      %v551 = vunpack.c.l.b16 %v320
      %v552 = vunpack.c.l.b16 %v321
      %v553 = vunpack.c.l.b16 %v322
      %v554 = vunpack.c.l.b16 %v323
      %v555 = vunpack.c.l.b16 %v324
      %v556 = vunpack.c.l.b16 %v325
      %v557 = vunpack.c.l.b16 %v326
      %v558 = vunpack.c.l.b16 %v327
      %v559 = vunpack.c.l.b16 %v328
      %v560 = vunpack.c.l.b16 %v329
      %v561 = vunpack.c.l.b16 %v330
      %v562 = vunpack.c.l.b16 %v331
      %v563 = vunpack.c.l.b16 %v332
      %v564 = vunpack.c.l.b16 %v333
      %v565 = vunpack.c.l.b16 %v334
      %v566 = vunpack.c.l.b16 %v335
      %v567 = vunpack.c.l.b16 %v336
      %v568 = vunpack.c.l.b16 %v337
      %v569 = vunpack.c.l.b16 %v338
      %v570 = vunpack.c.l.b16 %v339
      %v571 = vunpack.c.l.b16 %v340
      %v572 = vunpack.c.l.b16 %v341
      %v573 = vunpack.c.l.b16 %v342
      %v574 = vunpack.c.l.b16 %v343
      %v575 = vunpack.c.l.b16 %v344
      %v576 = vunpack.c.l.b16 %v345
      %v577 = vunpack.c.l.b16 %v346
      %v578 = vunpack.c.l.b16 %v347
      %v579 = vunpack.c.l.b16 %v348
      %v580 = vunpack.c.l.b16 %v349
      %v581 = vpack.c.b16 %v550, %v549
      %v582 = vpack.c.b16 %v552, %v551
      %v583 = vpack.c.b16 %v554, %v553
      %v584 = vpack.c.b16 %v556, %v555
      %v585 = vpack.c.b16 %v558, %v557
      %v586 = vpack.c.b16 %v560, %v559
      %v587 = vpack.c.b16 %v562, %v561
      %v588 = vpack.c.b16 %v564, %v563
      %v589 = vpack.c.b16 %v566, %v565
      %v590 = vpack.c.b16 %v568, %v567
      %v591 = vpack.c.b16 %v570, %v569
      %v592 = vpack.c.b16 %v572, %v571
      %v593 = vpack.c.b16 %v574, %v573
      %v594 = vpack.c.b16 %v576, %v575
      %v595 = vpack.c.b16 %v578, %v577
      %v596 = vpack.c.b16 %v580, %v579
      %613 = vmatprep.subr.bf16.mxu0 0
      %614 = vmatpush1.bf16.msra.mxu0 %v588
      %615 = vmatprep.subr.bf16.mxu0 0
      %616 = vmatpush1.bf16.msra.mxu0 %v587
      %617 = vmatprep.subr.bf16.mxu0 0
      %618 = vmatpush1.bf16.msra.mxu0 %v586
      %619 = vmatprep.subr.bf16.mxu0 0
      %620 = vmatpush1.bf16.msra.mxu0 %v585
      %621 = vmatprep.subr.bf16.mxu0 0
      %622 = vmatpush1.bf16.msra.mxu0 %v584
      %623 = vmatprep.subr.bf16.mxu0 0
      %624 = vmatpush1.bf16.msra.mxu0 %v583
      %625 = vmatprep.subr.bf16.mxu0 0
      %626 = vmatpush1.bf16.msra.mxu0 %v582
      %627 = vmatprep.subr.bf16.mxu0 0
      %628 = vmatpush1.bf16.msra.mxu0 %v581
      %629 = vmatprep.subr.bf16.mxu0 0
      %630 = vmatpush2.bf16.msra.mxu0 %v596
      %631 = vmatprep.subr.bf16.mxu0 0
      %632 = vmatpush2.bf16.msra.mxu0 %v595
      %633 = vmatprep.subr.bf16.mxu0 0
      %634 = vmatpush2.bf16.msra.mxu0 %v594
      %635 = vmatprep.subr.bf16.mxu0 0
      %636 = vmatpush2.bf16.msra.mxu0 %v593
      %637 = vmatprep.subr.bf16.mxu0 0
      %638 = vmatpush2.bf16.msra.mxu0 %v592
      %639 = vmatprep.subr.bf16.mxu0 0
      %640 = vmatpush2.bf16.msra.mxu0 %v591
      %641 = vmatprep.subr.bf16.mxu0 0
      %642 = vmatpush2.bf16.msra.mxu0 %v590
      %643 = vmatprep.subr.bf16.mxu0 0
      %644 = vmatpush2.bf16.msra.mxu0 %v589
      %645 = vmatprep.mubr.bf16.mxu0 %v454
      %646 = vmatmul.mubr.bf16.gmra.mxu0 %v453
      %v647 = vpop.f32.mrf.mxu0
      %v648 = vadd.f32 %v355, %v647
      %v649 = vpop.f32.mrf.mxu0
      %v650 = vpop.f32.mrf.mxu0
      %v651 = vadd.f32 %v355, %v650
      %v652 = vpop.f32.mrf.mxu0
      %653 = vmatprep.mubr.bf16.mxu0 %v456
      %654 = vmatmul.mubr.bf16.gmra.mxu0 %v455
      %v655 = vpop.f32.mrf.mxu0
      %v656 = vadd.f32 %v355, %v655
      %v657 = vpop.f32.mrf.mxu0
      %v658 = vpop.f32.mrf.mxu0
      %v659 = vadd.f32 %v355, %v658
      %v660 = vpop.f32.mrf.mxu0
      %661 = vmatprep.mubr.bf16.mxu0 %v458
      %662 = vmatmul.mubr.bf16.gmra.mxu0 %v457
      %v663 = vpop.f32.mrf.mxu0
      %v664 = vadd.f32 %v355, %v663
      %v665 = vpop.f32.mrf.mxu0
      %v666 = vpop.f32.mrf.mxu0
      %v667 = vadd.f32 %v355, %v666
      %v668 = vpop.f32.mrf.mxu0
      %669 = vmatprep.mubr.bf16.mxu0 %v460
      %670 = vmatmul.mubr.bf16.gmra.mxu0 %v459
      %v671 = vpop.f32.mrf.mxu0
      %v672 = vadd.f32 %v355, %v671
      %v673 = vpop.f32.mrf.mxu0
      %v674 = vpop.f32.mrf.mxu0
      %v675 = vadd.f32 %v355, %v674
      %v676 = vpop.f32.mrf.mxu0
      %677 = vmatprep.mubr.bf16.mxu0 %v462
      %678 = vmatmul.mubr.bf16.gmra.mxu0 %v461
      %v679 = vpop.f32.mrf.mxu0
      %v680 = vadd.f32 %v355, %v679
      %v681 = vpop.f32.mrf.mxu0
      %v682 = vpop.f32.mrf.mxu0
      %v683 = vadd.f32 %v355, %v682
      %v684 = vpop.f32.mrf.mxu0
      %685 = vmatprep.mubr.bf16.mxu0 %v464
      %686 = vmatmul.mubr.bf16.gmra.mxu0 %v463
      %v687 = vpop.f32.mrf.mxu0
      %v688 = vadd.f32 %v355, %v687
      %v689 = vpop.f32.mrf.mxu0
      %v690 = vpop.f32.mrf.mxu0
      %v691 = vadd.f32 %v355, %v690
      %v692 = vpop.f32.mrf.mxu0
      %693 = vmatprep.mubr.bf16.mxu0 %v466
      %694 = vmatmul.mubr.bf16.gmra.mxu0 %v465
      %v695 = vpop.f32.mrf.mxu0
      %v696 = vadd.f32 %v355, %v695
      %v697 = vpop.f32.mrf.mxu0
      %v698 = vpop.f32.mrf.mxu0
      %v699 = vadd.f32 %v355, %v698
      %v700 = vpop.f32.mrf.mxu0
      %701 = vmatprep.mubr.bf16.mxu0 %v468
      %702 = vmatmul.mubr.bf16.gmra.mxu0 %v467
      %v703 = vpop.f32.mrf.mxu0
      %v704 = vadd.f32 %v355, %v703
      %v705 = vpop.f32.mrf.mxu0
      %v706 = vpop.f32.mrf.mxu0
      %v707 = vadd.f32 %v355, %v706
      %v708 = vpop.f32.mrf.mxu0
      %709 = vmatprep.mubr.bf16.mxu0 %v470
      %710 = vmatmul.mubr.bf16.gmra.mxu0 %v469
      %v711 = vpop.f32.mrf.mxu0
      %v712 = vadd.f32 %v355, %v711
      %v713 = vpop.f32.mrf.mxu0
      %v714 = vpop.f32.mrf.mxu0
      %v715 = vadd.f32 %v355, %v714
      %v716 = vpop.f32.mrf.mxu0
      %717 = vmatprep.mubr.bf16.mxu0 %v472
      %718 = vmatmul.mubr.bf16.gmra.mxu0 %v471
      %v719 = vpop.f32.mrf.mxu0
      %v720 = vadd.f32 %v355, %v719
      %v721 = vpop.f32.mrf.mxu0
      %v722 = vpop.f32.mrf.mxu0
      %v723 = vadd.f32 %v355, %v722
      %v724 = vpop.f32.mrf.mxu0
      %725 = vmatprep.mubr.bf16.mxu0 %v474
      %726 = vmatmul.mubr.bf16.gmra.mxu0 %v473
      %v727 = vpop.f32.mrf.mxu0
      %v728 = vadd.f32 %v355, %v727
      %v729 = vpop.f32.mrf.mxu0
      %v730 = vpop.f32.mrf.mxu0
      %v731 = vadd.f32 %v355, %v730
      %v732 = vpop.f32.mrf.mxu0
      %733 = vmatprep.mubr.bf16.mxu0 %v476
      %734 = vmatmul.mubr.bf16.gmra.mxu0 %v475
      %v735 = vpop.f32.mrf.mxu0
      %v736 = vadd.f32 %v355, %v735
      %v737 = vpop.f32.mrf.mxu0
      %v738 = vpop.f32.mrf.mxu0
      %v739 = vadd.f32 %v355, %v738
      %v740 = vpop.f32.mrf.mxu0
      %741 = vmatprep.mubr.bf16.mxu0 %v478
      %742 = vmatmul.mubr.bf16.gmra.mxu0 %v477
      %v743 = vpop.f32.mrf.mxu0
      %v744 = vadd.f32 %v355, %v743
      %v745 = vpop.f32.mrf.mxu0
      %v746 = vpop.f32.mrf.mxu0
      %v747 = vadd.f32 %v355, %v746
      %v748 = vpop.f32.mrf.mxu0
      %749 = vmatprep.mubr.bf16.mxu0 %v480
      %750 = vmatmul.mubr.bf16.gmra.mxu0 %v479
      %v751 = vpop.f32.mrf.mxu0
      %v752 = vadd.f32 %v355, %v751
      %v753 = vpop.f32.mrf.mxu0
      %v754 = vpop.f32.mrf.mxu0
      %v755 = vadd.f32 %v355, %v754
      %v756 = vpop.f32.mrf.mxu0
      %757 = vmatprep.mubr.bf16.mxu0 %v482
      %758 = vmatmul.mubr.bf16.gmra.mxu0 %v481
      %v759 = vpop.f32.mrf.mxu0
      %v760 = vadd.f32 %v355, %v759
      %v761 = vpop.f32.mrf.mxu0
      %v762 = vpop.f32.mrf.mxu0
      %v763 = vadd.f32 %v355, %v762
      %v764 = vpop.f32.mrf.mxu0
      %765 = vmatprep.mubr.bf16.mxu0 %v484
      %766 = vmatmul.mubr.bf16.gmra.mxu0 %v483
      %v767 = vpop.f32.mrf.mxu0
      %v768 = vadd.f32 %v355, %v767
      %v769 = vpop.f32.mrf.mxu0
      %v770 = vpop.f32.mrf.mxu0
      %v771 = vadd.f32 %v355, %v770
      %v772 = vpop.f32.mrf.mxu0
      %773 = vdwg.mxu0
      %v774 = vmax.f32 %v648, 0.0
      %v775 = vmax.f32 %v651, 0.0
      %v776 = vmax.f32 %v656, 0.0
      %v777 = vmax.f32 %v659, 0.0
      %v778 = vmax.f32 %v664, 0.0
      %v779 = vmax.f32 %v667, 0.0
      %v780 = vmax.f32 %v672, 0.0
      %v781 = vmax.f32 %v675, 0.0
      %v782 = vmax.f32 %v680, 0.0
      %v783 = vmax.f32 %v683, 0.0
      %v784 = vmax.f32 %v688, 0.0
      %v785 = vmax.f32 %v691, 0.0
      %v786 = vmax.f32 %v696, 0.0
      %v787 = vmax.f32 %v699, 0.0
      %v788 = vmax.f32 %v704, 0.0
      %v789 = vmax.f32 %v707, 0.0
      %v790 = vmax.f32 %v712, 0.0
      %v791 = vmax.f32 %v715, 0.0
      %v792 = vmax.f32 %v720, 0.0
      %v793 = vmax.f32 %v723, 0.0
      %v794 = vmax.f32 %v728, 0.0
      %v795 = vmax.f32 %v731, 0.0
      %v796 = vmax.f32 %v736, 0.0
      %v797 = vmax.f32 %v739, 0.0
      %v798 = vmax.f32 %v744, 0.0
      %v799 = vmax.f32 %v747, 0.0
      %v800 = vmax.f32 %v752, 0.0
      %v801 = vmax.f32 %v755, 0.0
      %v802 = vmax.f32 %v760, 0.0
      %v803 = vmax.f32 %v763, 0.0
      %v804 = vmax.f32 %v768, 0.0
      %v805 = vmax.f32 %v771, 0.0
      %v806 = vpack.c.bf16 %v775, %v774
      %v807 = vpack.c.bf16 %v777, %v776
      %v808 = vpack.c.bf16 %v779, %v778
      %v809 = vpack.c.bf16 %v781, %v780
      %v810 = vpack.c.bf16 %v783, %v782
      %v811 = vpack.c.bf16 %v785, %v784
      %v812 = vpack.c.bf16 %v787, %v786
      %v813 = vpack.c.bf16 %v789, %v788
      %v814 = vpack.c.bf16 %v791, %v790
      %v815 = vpack.c.bf16 %v793, %v792
      %v816 = vpack.c.bf16 %v795, %v794
      %v817 = vpack.c.bf16 %v797, %v796
      %v818 = vpack.c.bf16 %v799, %v798
      %v819 = vpack.c.bf16 %v801, %v800
      %v820 = vpack.c.bf16 %v803, %v802
      %v821 = vpack.c.bf16 %v805, %v804
      %v822 = vld [vmem:[%s3] sm:$0xf]
      %v823 = vld [vmem:[%s3 + $0x4] sm:$0xf]
      %v824 = vld [vmem:[%s3 + $0x8] sm:$0xf]
      %v825 = vld [vmem:[%s3 + $0xc] sm:$0xf]
      %v826 = vld [vmem:[%s3 + $0x10] sm:$0xf]
      %v827 = vld [vmem:[%s3 + $0x14] sm:$0xf]
      %v828 = vld [vmem:[%s3 + $0x18] sm:$0xf]
      %v829 = vld [vmem:[%s3 + $0x1c] sm:$0xf]
      %v830 = vld [vmem:[%s3 + $0x20] sm:$0xf]
      %v831 = vld [vmem:[%s3 + $0x24] sm:$0xf]
      %v832 = vld [vmem:[%s3 + $0x28] sm:$0xf]
      %v833 = vld [vmem:[%s3 + $0x2c] sm:$0xf]
      %v834 = vld [vmem:[%s3 + $0x30] sm:$0xf]
      %v835 = vld [vmem:[%s3 + $0x34] sm:$0xf]
      %v836 = vld [vmem:[%s3 + $0x38] sm:$0xf]
      %v837 = vld [vmem:[%s3 + $0x3c] sm:$0xf]
      %v838 = vld [vmem:[%s4] sm:$0x1]
      %v840 = vlaneseq
      %v841 = vshrl.u32 %v840, 7
      %v842 = vsub.s32 0, %v841
      %v843 = vrot.slane %v838, %v842
      %v861 = vunpack.c.l.b16 %v822
      %v862 = vunpack.c.l.b16 %v823
      %v863 = vunpack.c.l.b16 %v824
      %v864 = vunpack.c.l.b16 %v825
      %v865 = vunpack.c.l.b16 %v826
      %v866 = vunpack.c.l.b16 %v827
      %v867 = vunpack.c.l.b16 %v828
      %v868 = vunpack.c.l.b16 %v829
      %v869 = vunpack.c.l.b16 %v830
      %v870 = vunpack.c.l.b16 %v831
      %v871 = vunpack.c.l.b16 %v832
      %v872 = vunpack.c.l.b16 %v833
      %v873 = vunpack.c.l.b16 %v834
      %v874 = vunpack.c.l.b16 %v835
      %v875 = vunpack.c.l.b16 %v836
      %v876 = vunpack.c.l.b16 %v837
      %v877 = vpack.c.b16 %v862, %v861
      %v878 = vpack.c.b16 %v864, %v863
      %v879 = vpack.c.b16 %v866, %v865
      %v880 = vpack.c.b16 %v868, %v867
      %v881 = vpack.c.b16 %v870, %v869
      %v882 = vpack.c.b16 %v872, %v871
      %v883 = vpack.c.b16 %v874, %v873
      %v884 = vpack.c.b16 %v876, %v875
      %893 = vmatprep.subr.bf16.mxu0 0
      %894 = vmatpush1.bf16.msra.mxu0 %v884
      %895 = vmatprep.subr.bf16.mxu0 0
      %896 = vmatpush1.bf16.msra.mxu0 %v883
      %897 = vmatprep.subr.bf16.mxu0 0
      %898 = vmatpush1.bf16.msra.mxu0 %v882
      %899 = vmatprep.subr.bf16.mxu0 0
      %900 = vmatpush1.bf16.msra.mxu0 %v881
      %901 = vmatprep.subr.bf16.mxu0 0
      %902 = vmatpush1.bf16.msra.mxu0 %v880
      %903 = vmatprep.subr.bf16.mxu0 0
      %904 = vmatpush1.bf16.msra.mxu0 %v879
      %905 = vmatprep.subr.bf16.mxu0 0
      %906 = vmatpush1.bf16.msra.mxu0 %v878
      %907 = vmatprep.subr.bf16.mxu0 0
      %908 = vmatpush1.bf16.msra.mxu0 %v877
      %909 = vmatprep.subr.bf16.mxu0 0
      %910 = vmatpush2.bf16.msra.mxu0 0
      %911 = vmatprep.subr.bf16.mxu0 0
      %912 = vmatpush2.bf16.msra.mxu0 0
      %913 = vmatprep.subr.bf16.mxu0 0
      %914 = vmatpush2.bf16.msra.mxu0 0
      %915 = vmatprep.subr.bf16.mxu0 0
      %916 = vmatpush2.bf16.msra.mxu0 0
      %917 = vmatprep.subr.bf16.mxu0 0
      %918 = vmatpush2.bf16.msra.mxu0 0
      %919 = vmatprep.subr.bf16.mxu0 0
      %920 = vmatpush2.bf16.msra.mxu0 0
      %921 = vmatprep.subr.bf16.mxu0 0
      %922 = vmatpush2.bf16.msra.mxu0 0
      %923 = vmatprep.subr.bf16.mxu0 0
      %924 = vmatpush2.bf16.msra.mxu0 0
      %925 = vmatprep.mubr.bf16.mxu0 0
      %926 = vmatmul.mubr.bf16.gmra.mxu0 %v806
      %v927 = vpop.f32.mrf.mxu0
      %v928 = vadd.f32 %v843, %v927
      %v929 = vpop.f32.mrf.mxu0
      %v930 = vpop.f32.mrf.mxu0
      %v931 = vadd.f32 %v843, %v930
      %v932 = vpop.f32.mrf.mxu0
      %933 = vmatprep.mubr.bf16.mxu0 0
      %934 = vmatmul.mubr.bf16.gmra.mxu0 %v807
      %v935 = vpop.f32.mrf.mxu0
      %v936 = vadd.f32 %v843, %v935
      %v937 = vpop.f32.mrf.mxu0
      %v938 = vpop.f32.mrf.mxu0
      %v939 = vadd.f32 %v843, %v938
      %v940 = vpop.f32.mrf.mxu0
      %941 = vmatprep.mubr.bf16.mxu0 0
      %942 = vmatmul.mubr.bf16.gmra.mxu0 %v808
      %v943 = vpop.f32.mrf.mxu0
      %v944 = vadd.f32 %v843, %v943
      %v945 = vpop.f32.mrf.mxu0
      %v946 = vpop.f32.mrf.mxu0
      %v947 = vadd.f32 %v843, %v946
      %v948 = vpop.f32.mrf.mxu0
      %949 = vmatprep.mubr.bf16.mxu0 0
      %950 = vmatmul.mubr.bf16.gmra.mxu0 %v809
      %v951 = vpop.f32.mrf.mxu0
      %v952 = vadd.f32 %v843, %v951
      %v953 = vpop.f32.mrf.mxu0
      %v954 = vpop.f32.mrf.mxu0
      %v955 = vadd.f32 %v843, %v954
      %v956 = vpop.f32.mrf.mxu0
      %957 = vmatprep.mubr.bf16.mxu0 0
      %958 = vmatmul.mubr.bf16.gmra.mxu0 %v810
      %v959 = vpop.f32.mrf.mxu0
      %v960 = vadd.f32 %v843, %v959
      %v961 = vpop.f32.mrf.mxu0
      %v962 = vpop.f32.mrf.mxu0
      %v963 = vadd.f32 %v843, %v962
      %v964 = vpop.f32.mrf.mxu0
      %965 = vmatprep.mubr.bf16.mxu0 0
      %966 = vmatmul.mubr.bf16.gmra.mxu0 %v811
      %v967 = vpop.f32.mrf.mxu0
      %v968 = vadd.f32 %v843, %v967
      %v969 = vpop.f32.mrf.mxu0
      %v970 = vpop.f32.mrf.mxu0
      %v971 = vadd.f32 %v843, %v970
      %v972 = vpop.f32.mrf.mxu0
      %973 = vmatprep.mubr.bf16.mxu0 0
      %974 = vmatmul.mubr.bf16.gmra.mxu0 %v812
      %v975 = vpop.f32.mrf.mxu0
      %v976 = vadd.f32 %v843, %v975
      %v977 = vpop.f32.mrf.mxu0
      %v978 = vpop.f32.mrf.mxu0
      %v979 = vadd.f32 %v843, %v978
      %v980 = vpop.f32.mrf.mxu0
      %981 = vmatprep.mubr.bf16.mxu0 0
      %982 = vmatmul.mubr.bf16.gmra.mxu0 %v813
      %v983 = vpop.f32.mrf.mxu0
      %v984 = vadd.f32 %v843, %v983
      %v985 = vpop.f32.mrf.mxu0
      %v986 = vpop.f32.mrf.mxu0
      %v987 = vadd.f32 %v843, %v986
      %v988 = vpop.f32.mrf.mxu0
      %989 = vmatprep.mubr.bf16.mxu0 0
      %990 = vmatmul.mubr.bf16.gmra.mxu0 %v814
      %v991 = vpop.f32.mrf.mxu0
      %v992 = vadd.f32 %v843, %v991
      %v993 = vpop.f32.mrf.mxu0
      %v994 = vpop.f32.mrf.mxu0
      %v995 = vadd.f32 %v843, %v994
      %v996 = vpop.f32.mrf.mxu0
      %997 = vmatprep.mubr.bf16.mxu0 0
      %998 = vmatmul.mubr.bf16.gmra.mxu0 %v815
      %v999 = vpop.f32.mrf.mxu0
      %v1000 = vadd.f32 %v843, %v999
      %v1001 = vpop.f32.mrf.mxu0
      %v1002 = vpop.f32.mrf.mxu0
      %v1003 = vadd.f32 %v843, %v1002
      %v1004 = vpop.f32.mrf.mxu0
      %1005 = vmatprep.mubr.bf16.mxu0 0
      %1006 = vmatmul.mubr.bf16.gmra.mxu0 %v816
      %v1007 = vpop.f32.mrf.mxu0
      %v1008 = vadd.f32 %v843, %v1007
      %v1009 = vpop.f32.mrf.mxu0
      %v1010 = vpop.f32.mrf.mxu0
      %v1011 = vadd.f32 %v843, %v1010
      %v1012 = vpop.f32.mrf.mxu0
      %1013 = vmatprep.mubr.bf16.mxu0 0
      %1014 = vmatmul.mubr.bf16.gmra.mxu0 %v817
      %v1015 = vpop.f32.mrf.mxu0
      %v1016 = vadd.f32 %v843, %v1015
      %v1017 = vpop.f32.mrf.mxu0
      %v1018 = vpop.f32.mrf.mxu0
      %v1019 = vadd.f32 %v843, %v1018
      %v1020 = vpop.f32.mrf.mxu0
      %1021 = vmatprep.mubr.bf16.mxu0 0
      %1022 = vmatmul.mubr.bf16.gmra.mxu0 %v818
      %v1023 = vpop.f32.mrf.mxu0
      %v1024 = vadd.f32 %v843, %v1023
      %v1025 = vpop.f32.mrf.mxu0
      %v1026 = vpop.f32.mrf.mxu0
      %v1027 = vadd.f32 %v843, %v1026
      %v1028 = vpop.f32.mrf.mxu0
      %1029 = vmatprep.mubr.bf16.mxu0 0
      %1030 = vmatmul.mubr.bf16.gmra.mxu0 %v819
      %v1031 = vpop.f32.mrf.mxu0
      %v1032 = vadd.f32 %v843, %v1031
      %v1033 = vpop.f32.mrf.mxu0
      %v1034 = vpop.f32.mrf.mxu0
      %v1035 = vadd.f32 %v843, %v1034
      %v1036 = vpop.f32.mrf.mxu0
      %1037 = vmatprep.mubr.bf16.mxu0 0
      %1038 = vmatmul.mubr.bf16.gmra.mxu0 %v820
      %v1039 = vpop.f32.mrf.mxu0
      %v1040 = vadd.f32 %v843, %v1039
      %v1041 = vpop.f32.mrf.mxu0
      %v1042 = vpop.f32.mrf.mxu0
      %v1043 = vadd.f32 %v843, %v1042
      %v1044 = vpop.f32.mrf.mxu0
      %1045 = vmatprep.mubr.bf16.mxu0 0
      %1046 = vmatmul.mubr.bf16.gmra.mxu0 %v821
      %v1047 = vpop.f32.mrf.mxu0
      %v1048 = vadd.f32 %v843, %v1047
      %v1049 = vpop.f32.mrf.mxu0
      %v1050 = vpop.f32.mrf.mxu0
      %v1051 = vadd.f32 %v843, %v1050
      %v1052 = vpop.f32.mrf.mxu0
      %1053 = vdwg.mxu0
      %v1054 = vmax.f32 %v928, 0.0
      %v1055 = vmax.f32 %v931, 0.0
      %v1056 = vmax.f32 %v936, 0.0
      %v1057 = vmax.f32 %v939, 0.0
      %v1058 = vmax.f32 %v944, 0.0
      %v1059 = vmax.f32 %v947, 0.0
      %v1060 = vmax.f32 %v952, 0.0
      %v1061 = vmax.f32 %v955, 0.0
      %v1062 = vmax.f32 %v960, 0.0
      %v1063 = vmax.f32 %v963, 0.0
      %v1064 = vmax.f32 %v968, 0.0
      %v1065 = vmax.f32 %v971, 0.0
      %v1066 = vmax.f32 %v976, 0.0
      %v1067 = vmax.f32 %v979, 0.0
      %v1068 = vmax.f32 %v984, 0.0
      %v1069 = vmax.f32 %v987, 0.0
      %v1070 = vmax.f32 %v992, 0.0
      %v1071 = vmax.f32 %v995, 0.0
      %v1072 = vmax.f32 %v1000, 0.0
      %v1073 = vmax.f32 %v1003, 0.0
      %v1074 = vmax.f32 %v1008, 0.0
      %v1075 = vmax.f32 %v1011, 0.0
      %v1076 = vmax.f32 %v1016, 0.0
      %v1077 = vmax.f32 %v1019, 0.0
      %v1078 = vmax.f32 %v1024, 0.0
      %v1079 = vmax.f32 %v1027, 0.0
      %v1080 = vmax.f32 %v1032, 0.0
      %v1081 = vmax.f32 %v1035, 0.0
      %v1082 = vmax.f32 %v1040, 0.0
      %v1083 = vmax.f32 %v1043, 0.0
      %v1084 = vmax.f32 %v1048, 0.0
      %v1085 = vmax.f32 %v1051, 0.0
      %v1086 = vpack.c.bf16 %v1055, %v1054
      %v1087 = vpack.c.bf16 %v1057, %v1056
      %v1088 = vpack.c.bf16 %v1059, %v1058
      %v1089 = vpack.c.bf16 %v1061, %v1060
      %v1090 = vpack.c.bf16 %v1063, %v1062
      %v1091 = vpack.c.bf16 %v1065, %v1064
      %v1092 = vpack.c.bf16 %v1067, %v1066
      %v1093 = vpack.c.bf16 %v1069, %v1068
      %v1094 = vpack.c.bf16 %v1071, %v1070
      %v1095 = vpack.c.bf16 %v1073, %v1072
      %v1096 = vpack.c.bf16 %v1075, %v1074
      %v1097 = vpack.c.bf16 %v1077, %v1076
      %v1098 = vpack.c.bf16 %v1079, %v1078
      %v1099 = vpack.c.bf16 %v1081, %v1080
      %v1100 = vpack.c.bf16 %v1083, %v1082
      %v1101 = vpack.c.bf16 %v1085, %v1084
      %v1102 = vld [vmem:[%s5] sm:$0xf]
      %v1103 = vld [vmem:[%s5 + $0x4] sm:$0xf]
      %v1104 = vld [vmem:[%s5 + $0x8] sm:$0xf]
      %v1105 = vld [vmem:[%s5 + $0xc] sm:$0xf]
      %v1106 = vld [vmem:[%s5 + $0x10] sm:$0xf]
      %v1107 = vld [vmem:[%s5 + $0x14] sm:$0xf]
      %v1108 = vld [vmem:[%s5 + $0x18] sm:$0xf]
      %v1109 = vld [vmem:[%s5 + $0x1c] sm:$0xf]
      %v1110 = vld [vmem:[%s5 + $0x20] sm:$0xf]
      %v1111 = vld [vmem:[%s5 + $0x24] sm:$0xf]
      %v1112 = vld [vmem:[%s5 + $0x28] sm:$0xf]
      %v1113 = vld [vmem:[%s5 + $0x2c] sm:$0xf]
      %v1114 = vld [vmem:[%s5 + $0x30] sm:$0xf]
      %v1115 = vld [vmem:[%s5 + $0x34] sm:$0xf]
      %v1116 = vld [vmem:[%s5 + $0x38] sm:$0xf]
      %v1117 = vld [vmem:[%s5 + $0x3c] sm:$0xf]
      %v1118 = vld [vmem:[%s6] sm:$0x1]
      %v1120 = vlaneseq
      %v1121 = vshrl.u32 %v1120, 7
      %v1122 = vsub.s32 0, %v1121
      %v1123 = vrot.slane %v1118, %v1122
      %v1141 = vunpack.c.l.b16 %v1102
      %v1142 = vunpack.c.l.b16 %v1103
      %v1143 = vunpack.c.l.b16 %v1104
      %v1144 = vunpack.c.l.b16 %v1105
      %v1145 = vunpack.c.l.b16 %v1106
      %v1146 = vunpack.c.l.b16 %v1107
      %v1147 = vunpack.c.l.b16 %v1108
      %v1148 = vunpack.c.l.b16 %v1109
      %v1149 = vunpack.c.l.b16 %v1110
      %v1150 = vunpack.c.l.b16 %v1111
      %v1151 = vunpack.c.l.b16 %v1112
      %v1152 = vunpack.c.l.b16 %v1113
      %v1153 = vunpack.c.l.b16 %v1114
      %v1154 = vunpack.c.l.b16 %v1115
      %v1155 = vunpack.c.l.b16 %v1116
      %v1156 = vunpack.c.l.b16 %v1117
      %v1157 = vpack.c.b16 %v1142, %v1141
      %v1158 = vpack.c.b16 %v1144, %v1143
      %v1159 = vpack.c.b16 %v1146, %v1145
      %v1160 = vpack.c.b16 %v1148, %v1147
      %v1161 = vpack.c.b16 %v1150, %v1149
      %v1162 = vpack.c.b16 %v1152, %v1151
      %v1163 = vpack.c.b16 %v1154, %v1153
      %v1164 = vpack.c.b16 %v1156, %v1155
      %1173 = vmatprep.subr.bf16.mxu0 0
      %1174 = vmatpush1.bf16.msra.mxu0 %v1164
      %1175 = vmatprep.subr.bf16.mxu0 0
      %1176 = vmatpush1.bf16.msra.mxu0 %v1163
      %1177 = vmatprep.subr.bf16.mxu0 0
      %1178 = vmatpush1.bf16.msra.mxu0 %v1162
      %1179 = vmatprep.subr.bf16.mxu0 0
      %1180 = vmatpush1.bf16.msra.mxu0 %v1161
      %1181 = vmatprep.subr.bf16.mxu0 0
      %1182 = vmatpush1.bf16.msra.mxu0 %v1160
      %1183 = vmatprep.subr.bf16.mxu0 0
      %1184 = vmatpush1.bf16.msra.mxu0 %v1159
      %1185 = vmatprep.subr.bf16.mxu0 0
      %1186 = vmatpush1.bf16.msra.mxu0 %v1158
      %1187 = vmatprep.subr.bf16.mxu0 0
      %1188 = vmatpush1.bf16.msra.mxu0 %v1157
      %1189 = vmatprep.subr.bf16.mxu0 0
      %1190 = vmatpush2.bf16.msra.mxu0 0
      %1191 = vmatprep.subr.bf16.mxu0 0
      %1192 = vmatpush2.bf16.msra.mxu0 0
      %1193 = vmatprep.subr.bf16.mxu0 0
      %1194 = vmatpush2.bf16.msra.mxu0 0
      %1195 = vmatprep.subr.bf16.mxu0 0
      %1196 = vmatpush2.bf16.msra.mxu0 0
      %1197 = vmatprep.subr.bf16.mxu0 0
      %1198 = vmatpush2.bf16.msra.mxu0 0
      %1199 = vmatprep.subr.bf16.mxu0 0
      %1200 = vmatpush2.bf16.msra.mxu0 0
      %1201 = vmatprep.subr.bf16.mxu0 0
      %1202 = vmatpush2.bf16.msra.mxu0 0
      %1203 = vmatprep.subr.bf16.mxu0 0
      %1204 = vmatpush2.bf16.msra.mxu0 0
      %1205 = vmatprep.mubr.bf16.mxu0 0
      %1206 = vmatmul.mubr.bf16.gmra.mxu0 %v1086
      %v1207 = vpop.f32.mrf.mxu0
      %v1208 = vadd.f32 %v1123, %v1207
      %v1209 = vpop.f32.mrf.mxu0
      %v1210 = vpop.f32.mrf.mxu0
      %v1211 = vadd.f32 %v1123, %v1210
      %v1212 = vpop.f32.mrf.mxu0
      %1213 = vmatprep.mubr.bf16.mxu0 0
      %1214 = vmatmul.mubr.bf16.gmra.mxu0 %v1087
      %v1215 = vpop.f32.mrf.mxu0
      %v1216 = vadd.f32 %v1123, %v1215
      %v1217 = vpop.f32.mrf.mxu0
      %v1218 = vpop.f32.mrf.mxu0
      %v1219 = vadd.f32 %v1123, %v1218
      %v1220 = vpop.f32.mrf.mxu0
      %1221 = vmatprep.mubr.bf16.mxu0 0
      %1222 = vmatmul.mubr.bf16.gmra.mxu0 %v1088
      %v1223 = vpop.f32.mrf.mxu0
      %v1224 = vadd.f32 %v1123, %v1223
      %v1225 = vpop.f32.mrf.mxu0
      %v1226 = vpop.f32.mrf.mxu0
      %v1227 = vadd.f32 %v1123, %v1226
      %v1228 = vpop.f32.mrf.mxu0
      %1229 = vmatprep.mubr.bf16.mxu0 0
      %1230 = vmatmul.mubr.bf16.gmra.mxu0 %v1089
      %v1231 = vpop.f32.mrf.mxu0
      %v1232 = vadd.f32 %v1123, %v1231
      %v1233 = vpop.f32.mrf.mxu0
      %v1234 = vpop.f32.mrf.mxu0
      %v1235 = vadd.f32 %v1123, %v1234
      %v1236 = vpop.f32.mrf.mxu0
      %1237 = vmatprep.mubr.bf16.mxu0 0
      %1238 = vmatmul.mubr.bf16.gmra.mxu0 %v1090
      %v1239 = vpop.f32.mrf.mxu0
      %v1240 = vadd.f32 %v1123, %v1239
      %v1241 = vpop.f32.mrf.mxu0
      %v1242 = vpop.f32.mrf.mxu0
      %v1243 = vadd.f32 %v1123, %v1242
      %v1244 = vpop.f32.mrf.mxu0
      %1245 = vmatprep.mubr.bf16.mxu0 0
      %1246 = vmatmul.mubr.bf16.gmra.mxu0 %v1091
      %v1247 = vpop.f32.mrf.mxu0
      %v1248 = vadd.f32 %v1123, %v1247
      %v1249 = vpop.f32.mrf.mxu0
      %v1250 = vpop.f32.mrf.mxu0
      %v1251 = vadd.f32 %v1123, %v1250
      %v1252 = vpop.f32.mrf.mxu0
      %1253 = vmatprep.mubr.bf16.mxu0 0
      %1254 = vmatmul.mubr.bf16.gmra.mxu0 %v1092
      %v1255 = vpop.f32.mrf.mxu0
      %v1256 = vadd.f32 %v1123, %v1255
      %v1257 = vpop.f32.mrf.mxu0
      %v1258 = vpop.f32.mrf.mxu0
      %v1259 = vadd.f32 %v1123, %v1258
      %v1260 = vpop.f32.mrf.mxu0
      %1261 = vmatprep.mubr.bf16.mxu0 0
      %1262 = vmatmul.mubr.bf16.gmra.mxu0 %v1093
      %v1263 = vpop.f32.mrf.mxu0
      %v1264 = vadd.f32 %v1123, %v1263
      %v1265 = vpop.f32.mrf.mxu0
      %v1266 = vpop.f32.mrf.mxu0
      %v1267 = vadd.f32 %v1123, %v1266
      %v1268 = vpop.f32.mrf.mxu0
      %1269 = vmatprep.mubr.bf16.mxu0 0
      %1270 = vmatmul.mubr.bf16.gmra.mxu0 %v1094
      %v1271 = vpop.f32.mrf.mxu0
      %v1272 = vadd.f32 %v1123, %v1271
      %v1273 = vpop.f32.mrf.mxu0
      %v1274 = vpop.f32.mrf.mxu0
      %v1275 = vadd.f32 %v1123, %v1274
      %v1276 = vpop.f32.mrf.mxu0
      %1277 = vmatprep.mubr.bf16.mxu0 0
      %1278 = vmatmul.mubr.bf16.gmra.mxu0 %v1095
      %v1279 = vpop.f32.mrf.mxu0
      %v1280 = vadd.f32 %v1123, %v1279
      %v1281 = vpop.f32.mrf.mxu0
      %v1282 = vpop.f32.mrf.mxu0
      %v1283 = vadd.f32 %v1123, %v1282
      %v1284 = vpop.f32.mrf.mxu0
      %1285 = vmatprep.mubr.bf16.mxu0 0
      %1286 = vmatmul.mubr.bf16.gmra.mxu0 %v1096
      %v1287 = vpop.f32.mrf.mxu0
      %v1288 = vadd.f32 %v1123, %v1287
      %v1289 = vpop.f32.mrf.mxu0
      %v1290 = vpop.f32.mrf.mxu0
      %v1291 = vadd.f32 %v1123, %v1290
      %v1292 = vpop.f32.mrf.mxu0
      %1293 = vmatprep.mubr.bf16.mxu0 0
      %1294 = vmatmul.mubr.bf16.gmra.mxu0 %v1097
      %v1295 = vpop.f32.mrf.mxu0
      %v1296 = vadd.f32 %v1123, %v1295
      %v1297 = vpop.f32.mrf.mxu0
      %v1298 = vpop.f32.mrf.mxu0
      %v1299 = vadd.f32 %v1123, %v1298
      %v1300 = vpop.f32.mrf.mxu0
      %1301 = vmatprep.mubr.bf16.mxu0 0
      %1302 = vmatmul.mubr.bf16.gmra.mxu0 %v1098
      %v1303 = vpop.f32.mrf.mxu0
      %v1304 = vadd.f32 %v1123, %v1303
      %v1305 = vpop.f32.mrf.mxu0
      %v1306 = vpop.f32.mrf.mxu0
      %v1307 = vadd.f32 %v1123, %v1306
      %v1308 = vpop.f32.mrf.mxu0
      %1309 = vmatprep.mubr.bf16.mxu0 0
      %1310 = vmatmul.mubr.bf16.gmra.mxu0 %v1099
      %v1311 = vpop.f32.mrf.mxu0
      %v1312 = vadd.f32 %v1123, %v1311
      %v1313 = vpop.f32.mrf.mxu0
      %v1314 = vpop.f32.mrf.mxu0
      %v1315 = vadd.f32 %v1123, %v1314
      %v1316 = vpop.f32.mrf.mxu0
      %1317 = vmatprep.mubr.bf16.mxu0 0
      %1318 = vmatmul.mubr.bf16.gmra.mxu0 %v1100
      %v1319 = vpop.f32.mrf.mxu0
      %v1320 = vadd.f32 %v1123, %v1319
      %v1321 = vpop.f32.mrf.mxu0
      %v1322 = vpop.f32.mrf.mxu0
      %v1323 = vadd.f32 %v1123, %v1322
      %v1324 = vpop.f32.mrf.mxu0
      %1325 = vmatprep.mubr.bf16.mxu0 0
      %1326 = vmatmul.mubr.bf16.gmra.mxu0 %v1101
      %v1327 = vpop.f32.mrf.mxu0
      %v1328 = vadd.f32 %v1123, %v1327
      %v1329 = vpop.f32.mrf.mxu0
      %v1330 = vpop.f32.mrf.mxu0
      %v1331 = vadd.f32 %v1123, %v1330
      %v1332 = vpop.f32.mrf.mxu0
      %1333 = vdwg.mxu0
      %1334 = vst [vmem:[%s283] sm:$0xff] %v1208
      %1335 = vst [vmem:[%s283 + $0x8] sm:$0xff] %v1211
      %1336 = vst [vmem:[%s283 + $0x10] sm:$0xff] %v1216
      %1337 = vst [vmem:[%s283 + $0x18] sm:$0xff] %v1219
      %1338 = vst [vmem:[%s283 + $0x20] sm:$0xff] %v1224
      %1339 = vst [vmem:[%s283 + $0x28] sm:$0xff] %v1227
      %1340 = vst [vmem:[%s283 + $0x30] sm:$0xff] %v1232
      %1341 = vst [vmem:[%s283 + $0x38] sm:$0xff] %v1235
      %1342 = vst [vmem:[%s283 + $0x40] sm:$0xff] %v1240
      %1343 = vst [vmem:[%s283 + $0x48] sm:$0xff] %v1243
      %1344 = vst [vmem:[%s283 + $0x50] sm:$0xff] %v1248
      %1345 = vst [vmem:[%s283 + $0x58] sm:$0xff] %v1251
      %1346 = vst [vmem:[%s283 + $0x60] sm:$0xff] %v1256
      %1347 = vst [vmem:[%s283 + $0x68] sm:$0xff] %v1259
      %1348 = vst [vmem:[%s283 + $0x70] sm:$0xff] %v1264
      %1349 = vst [vmem:[%s283 + $0x78] sm:$0xff] %v1267
      %1350 = vst [vmem:[%s283 + $0x80] sm:$0xff] %v1272
      %1351 = vst [vmem:[%s283 + $0x88] sm:$0xff] %v1275
      %1352 = vst [vmem:[%s283 + $0x90] sm:$0xff] %v1280
      %1353 = vst [vmem:[%s283 + $0x98] sm:$0xff] %v1283
      %1354 = vst [vmem:[%s283 + $0xa0] sm:$0xff] %v1288
      %1355 = vst [vmem:[%s283 + $0xa8] sm:$0xff] %v1291
      %1356 = vst [vmem:[%s283 + $0xb0] sm:$0xff] %v1296
      %1357 = vst [vmem:[%s283 + $0xb8] sm:$0xff] %v1299
      %1358 = vst [vmem:[%s283 + $0xc0] sm:$0xff] %v1304
      %1359 = vst [vmem:[%s283 + $0xc8] sm:$0xff] %v1307
      %1360 = vst [vmem:[%s283 + $0xd0] sm:$0xff] %v1312
      %1361 = vst [vmem:[%s283 + $0xd8] sm:$0xff] %v1315
      %1362 = vst [vmem:[%s283 + $0xe0] sm:$0xff] %v1320
      %1363 = vst [vmem:[%s283 + $0xe8] sm:$0xff] %v1323
      %1364 = vst [vmem:[%s283 + $0xf0] sm:$0xff] %v1328
      %1365 = vst [vmem:[%s283 + $0xf8] sm:$0xff] %v1331
      %s1366 = smul.u32 32, %s18
      %p1367 = scmp.lt.s32.totalorder %s1366, 63
      %s1368 = scalar_select %p1367, %s1366, 63
      %s1369 = smul.addr %s1368, 8
      %s1370 = scalar_lea.vmem %s7, %s1369
      // Predicated region
      $region49: #{_lambda_.1} parent=47 // pred_check
        %p1371 = pneg %p188
      $region50: #{_lambda_.1} parent=47 // pred_check_branch
        %1373 = sbr.rel (%p1371) target = $region52
      $region51: #{_lambda_.1} parent=47 // pred_region
        %s1374 = smul.u32 32, %s18
      $region52: #{_lambda_.1} parent=47 // pred_fallthru
        _
    $region48: #{_lambda_.1} parent=5 // pred_fallthru
      _
    %p1375 = scmp.le.s32.totalorder 2, %s13
    // Predicated region
    $region53: #{_lambda_.1} parent=5 // pred_check
      %p1376 = pneg %p1375
    $region54: #{_lambda_.1} parent=5 // pred_check_branch
      %1378 = sbr.rel (%p1376) target = $region56
    $region55: #{_lambda_.1} parent=5 // pred_region
      %s1379 = ssub.s32 %s13, 2
      // Predicated region
      $region57: #{_lambda_.1} parent=55 // pred_check
        %p1380 = pneg %p194
      $region58: #{_lambda_.1} parent=55 // pred_check_branch
        %1382 = sbr.rel (%p1380) target = $region60
      $region59: #{_lambda_.1} parent=55 // pred_region
        %s1383 = smul.u32 32, %s19
        %p1384 = scmp.lt.s32.totalorder %s1383, 63
        %s1385 = scalar_select %p1384, %s1383, 63
        %s1386 = smul.addr %s1385, 8
        %s1387 = scalar_lea.vmem %s7, %s1386
      $region60: #{_lambda_.1} parent=55 // pred_fallthru
        _
    $region56: #{_lambda_.1} parent=5 // pred_fallthru
      _
  $region6: #{_lambda_.1} parent=0 // loop_footer
    %s17 = sadd.s32 1, %s13
  $region7: #{_lambda_.1} parent=0 // loop_footer_branch
    %12 = sbr.rel target = $region3
  $region8: #{_lambda_.1} parent=0 // loop_exit
    _

</llo_original>
